<compile_context>
chip_gen: v7x
topology: tpu7x:2x2x1
jax: 0.10.0
libtpu: 0.0.40
codegen_flags: <defaults>
</compile_context>

<pallas_src>
import math

import jax
import jax.numpy as jnp
from jax.experimental import pallas as pl
from jax.experimental.pallas import tpu as pltpu


def _round_up(a: int, b: int) -> int:
    return ((a + b - 1) // b) * b


# ----------------------------------------------------------------------------
# Parameter construction (matches the PyTorch FixedEmbedding table exactly)
# ----------------------------------------------------------------------------
def fixed_embedding_table(c_in: int, d_model: int) -> jnp.ndarray:
    assert d_model % 2 == 0, "sinusoidal table assumes even d_model"
    position = jnp.arange(c_in, dtype=jnp.float32)[:, None]              # [c_in, 1]
    div_term = jnp.exp(
        jnp.arange(0, d_model, 2, dtype=jnp.float32)
        * -(math.log(10000.0) / d_model)
    )                                                                    # [d_model//2]
    w = jnp.zeros((c_in, d_model), dtype=jnp.float32)
    w = w.at[:, 0::2].set(jnp.sin(position * div_term))
    w = w.at[:, 1::2].set(jnp.cos(position * div_term))
    return w


# ----------------------------------------------------------------------------
# Pallas kernel: one-hot(idx) @ table  (gather on the MXU)
# ----------------------------------------------------------------------------
def _make_lookup_kernel(c_in: int, kpad: int):
    def kernel(idx_ref, table_ref, out_ref):
        idx = jnp.clip(idx_ref[...], 0, c_in - 1)                        # [TN, 1] int32
        tn = idx.shape[0]
        lane_iota = jax.lax.broadcasted_iota(jnp.int32, (tn, kpad), 1)   # [TN, Kpad]
        onehot = (lane_iota == idx).astype(jnp.float32)                  # single cast
        out_ref[...] = jnp.dot(
            onehot, table_ref[...], preferred_element_type=jnp.float32
        )

    return kernel


# ----------------------------------------------------------------------------
# Wrapper (== FixedEmbedding.forward): x int[..., ] -> f32[..., d_model]
# ----------------------------------------------------------------------------
def fixed_embedding(x, c_in: int, d_model: int, *, row_tile: int = 512):
    orig_shape = x.shape
    N = 1
    for s in orig_shape:
        N *= int(s)
    idx_flat = x.reshape(N, 1).astype(jnp.int32)

    # Lane-align both matmul dims: K (vocab) and D (output) to 128.
    kpad = _round_up(c_in, 128)
    dpad = _round_up(d_model, 128)
    table = jnp.zeros((kpad, dpad), dtype=jnp.float32)
    table = table.at[:c_in, :d_model].set(fixed_embedding_table(c_in, d_model))

    # Row tile: large (amortizes per-step overhead, fills the MXU M dim) but
    # never larger than needed for small inputs; always a multiple of 8.
    TN = min(_round_up(row_tile, 8), _round_up(N, 8))
    NP = _round_up(N, TN)
    if NP != N:
        idx_flat = jnp.concatenate(
            [idx_flat, jnp.zeros((NP - N, 1), dtype=jnp.int32)], axis=0
        )

    kernel = _make_lookup_kernel(c_in, kpad)

    cost = pl.CostEstimate(
        flops=2 * NP * kpad * dpad,
        transcendentals=0,
        bytes_accessed=NP * 4 + kpad * dpad * 4 + NP * dpad * 4,  # output-dominated
    )

    out = pl.pallas_call(
        kernel,
        out_shape=jax.ShapeDtypeStruct((NP, dpad), jnp.float32),
        grid_spec=pltpu.PrefetchScalarGridSpec(
            num_scalar_prefetch=0,
            grid=(NP // TN,),
            in_specs=[
                pl.BlockSpec((TN, 1), lambda i: (i, 0)),        # index tile
                pl.BlockSpec((kpad, dpad), lambda i: (0, 0)),   # resident table
            ],
            out_specs=pl.BlockSpec((TN, dpad), lambda i: (i, 0)),  # lane-dense out
        ),
        compiler_params=pltpu.CompilerParams(
            dimension_semantics=("parallel",),
            vmem_limit_bytes=32 * 1024 * 1024,
        ),
        cost_estimate=cost,
    )(idx_flat, table)

    # Drop row padding and lane padding, restore original leading shape.
    return out[:N, :d_model].reshape(*orig_shape, d_model)


# ----------------------------------------------------------------------------
# Reference (pure JAX gather) for a sanity check
# ----------------------------------------------------------------------------
def fixed_embedding_ref(x, c_in, d_model):
    return fixed_embedding_table(c_in, d_model)[x.astype(jnp.int32)]


if __name__ == "__main__":
    key = jax.random.PRNGKey(0)
    B, L = 2, 8
    c_in, d_model = 24, 32          # e.g. the "hour" FixedEmbedding(24, d_model)
    x = jax.random.randint(key, (B, L), 0, c_in, dtype=jnp.int32)   # [B, L] indices

    out = fixed_embedding(x, c_in, d_model)
    out = jax.block_until_ready(out)

    ref = fixed_embedding_ref(x, c_in, d_model)
    assert out.shape == (B, L, d_model)
    assert jnp.allclose(out, ref, atol=1e-5, rtol=1e-5), "mismatch vs reference"

    print("KERNEL_OK")
</pallas_src>

<mosaic_0001>
module attributes {stable_mosaic.version = 11 : i64} {
  func.func @kernel(%arg0: i32, %arg1: memref<16x1xi32, #tpu.memory_space<vmem>>, %arg2: memref<128x128xf32, #tpu.memory_space<vmem>>, %arg3: memref<16x128xf32, #tpu.memory_space<vmem>>) attributes {dimension_semantics = [#tpu.dimension_semantics<parallel>], iteration_bounds = array<i64: 1>, scalar_prefetch = 0 : i64, scratch_operands = 0 : i64, tpu.core_type = #tpu.core_type<tc>, window_params = [{transform_indices = @transform_0, window_bounds = array<i64: 16, 1>}, {pipeline_mode = #tpu.pipeline_mode<synchronous>, transform_indices = @transform_1, window_bounds = array<i64: 128, 128>}, {transform_indices = @transform_2, window_bounds = array<i64: 16, 128>}]} {
    %c0 = arith.constant 0 : index
    %c0_0 = arith.constant 0 : index
    %0 = vector.load %arg1[%c0, %c0_0] : memref<16x1xi32, #tpu.memory_space<vmem>>, vector<16x1xi32>
    %c0_i32 = arith.constant 0 : i32
    %c23_i32 = arith.constant 23 : i32
    %1 = vector.broadcast %c0_i32 : i32 to vector<16x1xi32>
    %2 = arith.maxsi %1, %0 : vector<16x1xi32>
    %3 = vector.broadcast %c23_i32 : i32 to vector<16x1xi32>
    %4 = arith.minsi %3, %2 : vector<16x1xi32>
    %5 = tpu.iota {dimensions = array<i32: 1>} : vector<16x128xi32>
    %6 = vector.broadcast %4 : vector<16x1xi32> to vector<16x128xi32>
    %7 = arith.cmpi eq, %5, %6 : vector<16x128xi32>
    %8 = arith.extui %7 : vector<16x128xi1> to vector<16x128xi32>
    %9 = arith.sitofp %8 : vector<16x128xi32> to vector<16x128xf32>
    %c0_1 = arith.constant 0 : index
    %c0_2 = arith.constant 0 : index
    %10 = vector.load %arg2[%c0_1, %c0_2] : memref<128x128xf32, #tpu.memory_space<vmem>>, vector<128x128xf32>
    %cst = arith.constant dense<0.000000e+00> : vector<16x128xf32>
    %11 = tpu.matmul %9, %10, %cst {dimension_numbers = #tpu.dot_dimension_numbers<[1], [0], [0], [1], [0, 0, 1, 1], [], []>} : vector<16x128xf32>, vector<128x128xf32>, vector<16x128xf32> -> vector<16x128xf32>
    %c0_3 = arith.constant 0 : index
    %c0_4 = arith.constant 0 : index
    %12 = vector.load %arg3[%c0_3, %c0_4] : memref<16x128xf32, #tpu.memory_space<vmem>>, vector<16x128xf32>
    tpu.vector_store %arg3[%c0_3, %c0_4], %11 {strides = array<i32>} : memref<16x128xf32, #tpu.memory_space<vmem>>, vector<16x128xf32>,
    return
  }
  func.func @transform_0(%arg0: i32) -> (i32, i32) {
    %c0_i32 = arith.constant 0 : i32
    %c0_i32_0 = arith.constant 0 : i32
    return %arg0, %c0_i32 : i32, i32
  }
  func.func @transform_1(%arg0: i32) -> (i32, i32) {
    %c0_i32 = arith.constant 0 : i32
    %c0_i32_0 = arith.constant 0 : i32
    %c0_i32_1 = arith.constant 0 : i32
    return %c0_i32, %c0_i32_0 : i32, i32
  }
  func.func @transform_2(%arg0: i32) -> (i32, i32) {
    %c0_i32 = arith.constant 0 : i32
    %c0_i32_0 = arith.constant 0 : i32
    return %arg0, %c0_i32 : i32, i32
  }
}

</mosaic_0001>

<llo_original>
// kernel: tpu_custom_call.1
$region0: #{tpu_custom_call.1}
  #allocation0 [shape = 'u32[]', space=smem, size = 0x4, offset = 0x4, fixed_abs, tag = 'smem constant byte address 0x4 - core index']
  #allocation1 [shape = 'u32[144,128]{1,0:T(1,128)}', space=vmem, size = 0x12000, scoped, tag = 'internal scratch']
  %s0 = inlined_call_operand.vmem [shape: s32[16,1], index: 0, kind: input, shape index: {}]
  %s1 = inlined_call_operand.hbm [shape: f32[128,128], index: 1, kind: input, shape index: {}]
  %s2 = inlined_call_operand.hbm [shape: f32[16,128], index: 2, kind: output, shape index: {}]
  %s3 = sld [smem:[#allocation0]]
  $region22: #{tpu_custom_call.1} parent=0
    _
  %s5 = ssub.s32 1, %s3
  %s6 = scalar_select 0, %s5, %s3
  $region1: #{tpu_custom_call.1} parent=0
    #allocation2 [shape = 'u8[65536]{0}', space=vmem, size = 0x10000, scoped, tag = 'input window, operand 1, single buffered']
    #allocation3 [shape = 's32[1]{0}', space=sflag, size = 0x4, scoped, tag = 'scoped memory for tpu_custom_call.1']
    #allocation4 [shape = 's32[1]{0}', space=sflag, size = 0x4, scoped, tag = 'scoped memory for tpu_custom_call.1']
    #allocation5 [shape = 'u8[8192]{0}', space=vmem, size = 0x2000, scoped, tag = 'output window, operand 0, single buffered']
    %7 = vsyncpa [#allocation3], 0
    %8 = vsyncpa [#allocation4], 0
    // Predicated region
    $region2: #{tpu_custom_call.1} parent=1 // pred_check
      _
    $region3: #{tpu_custom_call.1} parent=1 // pred_check_branch
      %10 = sbr.rel (0) target = $region5
    $region4: #{tpu_custom_call.1} parent=1 // pred_region
      _
    $region5: #{tpu_custom_call.1} parent=1 // pred_fallthru
      _
    // Predicated region
    $region6: #{tpu_custom_call.1} parent=1 // pred_check
      _
    $region7: #{tpu_custom_call.1} parent=1 // pred_check_branch
      %12 = sbr.rel (0) target = $region9
    $region8: #{tpu_custom_call.1} parent=1 // pred_region
      %s14 = ssub.s32 2048, 2048
      %15 = vsyncadd [#allocation3], %s14
      %s16 = sshll.u32 [#allocation2], 4
      %s17 = int_to_ptr.vmem [resolvable:$true] %s16
      %22 = dma.hbm_to_vmem [thread:$0]  %s1, 2048, %s17, [#allocation3], 128, 128, 8
    $region9: #{tpu_custom_call.1} parent=1 // pred_fallthru
      _
    // Predicated region
    $region10: #{tpu_custom_call.1} parent=1 // pred_check
      _
    $region11: #{tpu_custom_call.1} parent=1 // pred_check_branch
      %24 = sbr.rel (0) target = $region13
    $region12: #{tpu_custom_call.1} parent=1 // pred_region
      %25 = dma.done [#allocation3], 2048
    $region13: #{tpu_custom_call.1} parent=1 // pred_fallthru
      _
    %v26 = vld [vmem:[%s0] sm:$0xff]
    %v27 = vld [vmem:[%s0 + $0x8] sm:$0xff]
    %vm28 = vcmp.gt.s32.totalorder %v26, 0
    %v29 = vsel %vm28, %v26, 0
    %vm30 = vcmp.gt.s32.totalorder %v27, 0
    %v31 = vsel %vm30, %v27, 0
    %vm32 = vcmp.lt.s32.totalorder %v29, 23
    %v33 = vsel %vm32, %v29, 23
    %vm34 = vcmp.lt.s32.totalorder %v31, 23
    %v35 = vsel %vm34, %v31, 23
    %v36 = vlaneseq
    %v37 = vand.u32 %v36, 127
    %38 = vset.pattern.permute.xlu0 0
    %39 = vperm.xlu0 %38, %v33
    %v40 = vpop.permute.xlu0 %39
    %41 = vset.pattern.permute.xlu0 0
    %42 = vperm.xlu0 %41, %v35
    %v43 = vpop.permute.xlu0 %42
    %vm44 = vcmp.eq.s32.totalorder %v37, %v40
    %vm45 = vcmp.eq.s32.totalorder %v37, %v43
    %v46 = vsel %vm44, 1, 0
    %v47 = vsel %vm45, 1, 0
    %v48 = vcvt.s32.f32 %v46
    %v49 = vcvt.s32.f32 %v47
    %v50 = vld [vmem:[#allocation2] sm:$0xff]
    %v51 = vld [vmem:[#allocation2 + $0x8] sm:$0xff]
    %v52 = vld [vmem:[#allocation2 + $0x10] sm:$0xff]
    %v53 = vld [vmem:[#allocation2 + $0x18] sm:$0xff]
    %v54 = vld [vmem:[#allocation2 + $0x20] sm:$0xff]
    %v55 = vld [vmem:[#allocation2 + $0x28] sm:$0xff]
    %v56 = vld [vmem:[#allocation2 + $0x30] sm:$0xff]
    %v57 = vld [vmem:[#allocation2 + $0x38] sm:$0xff]
    %v58 = vld [vmem:[#allocation2 + $0x40] sm:$0xff]
    %v59 = vld [vmem:[#allocation2 + $0x48] sm:$0xff]
    %v60 = vld [vmem:[#allocation2 + $0x50] sm:$0xff]
    %v61 = vld [vmem:[#allocation2 + $0x58] sm:$0xff]
    %v62 = vld [vmem:[#allocation2 + $0x60] sm:$0xff]
    %v63 = vld [vmem:[#allocation2 + $0x68] sm:$0xff]
    %v64 = vld [vmem:[#allocation2 + $0x70] sm:$0xff]
    %v65 = vld [vmem:[#allocation2 + $0x78] sm:$0xff]
    %66 = vmatprep.subr.mxu0 0.0
    %67 = vmatpush1.msra.mxu0 %v50
    %68 = vmatprep.subr.mxu0 0.0
    %69 = vmatpush1.msra.mxu0 %v51
    %70 = vmatprep.subr.mxu0 0.0
    %71 = vmatpush1.msra.mxu0 %v52
    %72 = vmatprep.subr.mxu0 0.0
    %73 = vmatpush1.msra.mxu0 %v53
    %74 = vmatprep.subr.mxu0 0.0
    %75 = vmatpush1.msra.mxu0 %v54
    %76 = vmatprep.subr.mxu0 0.0
    %77 = vmatpush1.msra.mxu0 %v55
    %78 = vmatprep.subr.mxu0 0.0
    %79 = vmatpush1.msra.mxu0 %v56
    %80 = vmatprep.subr.mxu0 0.0
    %81 = vmatpush1.msra.mxu0 %v57
    %82 = vmatprep.subr.mxu0 0.0
    %83 = vmatpush1.msra.mxu0 %v58
    %84 = vmatprep.subr.mxu0 0.0
    %85 = vmatpush1.msra.mxu0 %v59
    %86 = vmatprep.subr.mxu0 0.0
    %87 = vmatpush1.msra.mxu0 %v60
    %88 = vmatprep.subr.mxu0 0.0
    %89 = vmatpush1.msra.mxu0 %v61
    %90 = vmatprep.subr.mxu0 0.0
    %91 = vmatpush1.msra.mxu0 %v62
    %92 = vmatprep.subr.mxu0 0.0
    %93 = vmatpush1.msra.mxu0 %v63
    %94 = vmatprep.subr.mxu0 0.0
    %95 = vmatpush1.msra.mxu0 %v64
    %96 = vmatprep.subr.mxu0 0.0
    %97 = vmatpush1.msra.mxu0 %v65
    %98 = vmatprep.subr.mxu0 0.0
    %99 = vmatpush1.msra.mxu0 0.0
    %100 = vmatprep.subr.mxu0 0.0
    %101 = vmatpush1.msra.mxu0 0.0
    %102 = vmatprep.subr.mxu0 0.0
    %103 = vmatpush1.msra.mxu0 0.0
    %104 = vmatprep.subr.mxu0 0.0
    %105 = vmatpush1.msra.mxu0 0.0
    %106 = vmatprep.subr.mxu0 0.0
    %107 = vmatpush1.msra.mxu0 0.0
    %108 = vmatprep.subr.mxu0 0.0
    %109 = vmatpush1.msra.mxu0 0.0
    %110 = vmatprep.subr.mxu0 0.0
    %111 = vmatpush1.msra.mxu0 0.0
    %112 = vmatprep.subr.mxu0 0.0
    %113 = vmatpush1.msra.mxu0 0.0
    %114 = vmatprep.subr.mxu0 0.0
    %115 = vmatpush1.msra.mxu0 0.0
    %116 = vmatprep.subr.mxu0 0.0
    %117 = vmatpush1.msra.mxu0 0.0
    %118 = vmatprep.subr.mxu0 0.0
    %119 = vmatpush1.msra.mxu0 0.0
    %120 = vmatprep.subr.mxu0 0.0
    %121 = vmatpush1.msra.mxu0 0.0
    %122 = vmatprep.subr.mxu0 0.0
    %123 = vmatpush1.msra.mxu0 0.0
    %124 = vmatprep.subr.mxu0 0.0
    %125 = vmatpush1.msra.mxu0 0.0
    %126 = vmatprep.subr.mxu0 0.0
    %127 = vmatpush1.msra.mxu0 0.0
    %128 = vmatprep.subr.mxu0 0.0
    %129 = vmatpush1.msra.mxu0 0.0
    %130 = vmatprep.mubr.f32.mxu0 0.0
    %131 = vmatmul.mubr.f32.gmra.mrb[0].mxu0 %v48
    %v132 = vpop.f32.mrb[0].mxu0
    %v133 = vadd.f32 0.0, %v132
    %v134 = vpop.f32.mrb[0].mxu0
    %135 = vmatprep.mubr.f32.mxu0 0.0
    %136 = vmatmul.mubr.f32.gmra.mrb[0].mxu0 %v49
    %v137 = vpop.f32.mrb[0].mxu0
    %v138 = vadd.f32 0.0, %v137
    %v139 = vpop.f32.mrb[0].mxu0
    %140 = vdwg.mxu0
    %141 = vst [vmem:[#allocation5] sm:$0xff] %v133
    %142 = vst [vmem:[#allocation5 + $0x8] sm:$0xff] %v138
    // Predicated region
    $region14: #{tpu_custom_call.1} parent=1 // pred_check
      _
    $region15: #{tpu_custom_call.1} parent=1 // pred_check_branch
      %144 = sbr.rel (0) target = $region17
    $region16: #{tpu_custom_call.1} parent=1 // pred_region
      %s146 = ssub.s32 256, 256
      %147 = vsyncadd [#allocation4], %s146
      %s148 = sshll.u32 [#allocation5], 4
      %s149 = int_to_ptr.vmem [resolvable:$true] %s148
      %154 = dma.vmem_to_hbm [thread:$0]  %s149, 256, %s2, [#allocation4], 128, 128, 8
    $region17: #{tpu_custom_call.1} parent=1 // pred_fallthru
      _
    // Predicated region
    $region18: #{tpu_custom_call.1} parent=1 // pred_check
      _
    $region19: #{tpu_custom_call.1} parent=1 // pred_check_branch
      %156 = sbr.rel (0) target = $region21
    $region20: #{tpu_custom_call.1} parent=1 // pred_region
      %157 = dma.done [#allocation4], 256
    $region21: #{tpu_custom_call.1} parent=1 // pred_fallthru
      _
    %158 = vsyncpa [#allocation3], 1
    %159 = vsyncpa [#allocation4], 1

</llo_original>
